<compile_context>
chip_gen: v7x
topology: tpu7x:2x2x1
jax: 0.10.0
libtpu: 0.0.40
codegen_flags: <defaults>
</compile_context>

<pallas_src>
import functools

import jax
import jax.numpy as jnp
from jax.experimental import pallas as pl
from jax.experimental.pallas import tpu as pltpu


def _round_up(a, b):
    return (a + b - 1) // b * b


def _physical_vmem_bytes():
    try:
        info = pltpu.get_tpu_info()
        v = getattr(info, "vmem_capacity_bytes", None)
        if v:
            return int(v)
    except Exception:
        pass
    return 64 * 2**20  # conservative default (v7x per-core VMEM)


def _vmem_limit(est_bytes):
    cap = min(int(0.85 * _physical_vmem_bytes()), 100 * 2**20)
    cap = max(cap, 16 * 2**20)
    return int(min(max(2 * est_bytes, 16 * 2**20), cap))


def _gat_attn_kernel(maskb_ref, s_ref, d_ref, xp_ref, b_ref, out_ref,
                     *, heads, hf, fuse_epilogue, negative_slope):
    """One row-tile of one GAT layer: masked softmax attention + aggregation (+bias+ELU)."""
    mask_bias = maskb_ref[...].astype(jnp.float32)     # (TM, Np): 0 on edges, -1e30 off-graph
    xp = xp_ref[...]                                   # (Np, hf) bf16 head-packed features

    for h in range(heads):
        lo = h * hf
        # raw logits for edges j->i (row = target i, col = source j)
        e = d_ref[:, h:h + 1] + s_ref[h:h + 1, :]      # (TM, Np)
        e = jnp.maximum(e, negative_slope * e)         # LeakyReLU(0.2): mul+max, no select
        e = e + mask_bias                              # additive mask
        m = jnp.max(e, axis=1, keepdims=True)
        p = jnp.exp(e - m)                             # off-graph entries underflow to exact 0
        denom = jnp.sum(p, axis=1, keepdims=True)      # >= 1 (self loop), never 0
        # un-normalized aggregation on the MXU (bf16 operands, f32 accumulation);
        # normalize the small (TM, hf) result afterwards (EUP reciprocal, otherwise idle).
        raw = jnp.dot(p.astype(jnp.bfloat16), xp,
                      preferred_element_type=jnp.float32)          # (TM, hf)
        out_h = raw * pl.reciprocal(denom, approx=True)
        if fuse_epilogue:
            res = out_h + b_ref[:, lo:lo + hf]
            res = jnp.where(res > 0.0, res,
                            jnp.exp(jnp.minimum(res, 0.0)) - 1.0)  # ELU
            out_ref[:, lo:lo + hf] = res.astype(out_ref.dtype)
        else:
            out_ref[:, lo:lo + hf] = out_h.astype(out_ref.dtype)


def _gat_conv_pallas(x, mask_bias, w, a_src, a_dst, bias, *, heads, concat, tm, n_pad,
                     negative_slope=0.2):
    """One GATConv layer (+ following ELU). x: (N, C) f32; mask_bias: (Np, Np) bf16."""
    n, c = x.shape
    f = w.shape[1] // heads
    c_pad = _round_up(c, 128)
    hf = _round_up(heads * f, 128)      # one packed 128-lane slab holds all heads
    out_w = heads * hf                  # each head writes its full slab; extracted afterwards
    fuse_epilogue = concat or heads == 1

    # ---- lane-dense, head-packed padding (wrapper side) ----
    x_p = jnp.zeros((n_pad, c_pad), jnp.float32).at[:n, :c].set(x)
    w_p = jnp.zeros((c_pad, hf), jnp.float32).at[:c, :heads * f].set(w)
    a_src_p = jnp.zeros((heads, hf), jnp.float32)
    a_dst_p = jnp.zeros((heads, hf), jnp.float32)
    for h in range(heads):
        a_src_p = a_src_p.at[h, h * f:(h + 1) * f].set(a_src[h])
        a_dst_p = a_dst_p.at[h, h * f:(h + 1) * f].set(a_dst[h])
    b_p = jnp.zeros((1, out_w), jnp.float32)
    if fuse_epilogue:
        for h in range(heads):
            b_h = bias[h * f:(h + 1) * f] if concat else bias[:f]
            b_p = b_p.at[0, h * hf + h * f: h * hf + (h + 1) * f].set(b_h)

    # ---- cheap O(N*C*F) pre-work left to XLA (done once, not per row tile / per core) ----
    xp = x_p @ w_p                      # (Np, hf) f32 head-packed projected features
    s = (xp @ a_src_p.T).T              # (H, Np)  per-source scores
    d = xp @ a_dst_p.T                  # (Np, H)  per-target scores
    xp_bf = xp.astype(jnp.bfloat16)     # bf16 MXU operand / halved residency

    grid = (n_pad // tm,)

    est_bytes = (2 * (tm * n_pad * 2 + tm * heads * 4 + tm * out_w * 4)   # double-buffered tiles
                 + heads * n_pad * 4 + n_pad * heads * 4 + n_pad * hf * 2 + out_w * 4  # resident
                 + 6 * tm * n_pad * 4)                                    # in-kernel temporaries
    flops = int(heads * (2 * n_pad * n_pad * hf + 8 * n_pad * n_pad))
    transcendentals = int(heads * n_pad * n_pad + n_pad * out_w)
    bytes_accessed = int(n_pad * n_pad * 2 + n_pad * hf * 2
                         + heads * n_pad * 8 + n_pad * out_w * 4)

    kernel = functools.partial(_gat_attn_kernel, heads=heads, hf=hf,
                               fuse_epilogue=fuse_epilogue, negative_slope=negative_slope)

    out_p = pl.pallas_call(
        kernel,
        grid=grid,
        in_specs=[
            pl.BlockSpec((tm, n_pad), lambda i: (i, 0)),      # additive softmax mask (bf16)
            pl.BlockSpec((heads, n_pad), lambda i: (0, 0)),   # per-source scores (resident)
            pl.BlockSpec((tm, heads), lambda i: (i, 0)),      # per-target scores, row tile
            pl.BlockSpec((n_pad, hf), lambda i: (0, 0)),      # packed projected feats (bf16)
            pl.BlockSpec((1, out_w), lambda i: (0, 0)),       # bias (slab layout)
        ],
        out_specs=pl.BlockSpec((tm, out_w), lambda i: (i, 0)),
        out_shape=jax.ShapeDtypeStruct((n_pad, out_w), jnp.float32),
        compiler_params=pltpu.CompilerParams(
            dimension_semantics=("parallel",),
            vmem_limit_bytes=_vmem_limit(est_bytes)),
        cost_estimate=pl.CostEstimate(flops=flops,
                                      transcendentals=transcendentals,
                                      bytes_accessed=bytes_accessed),
    )(mask_bias, s, d, xp_bf, b_p)

    # ---- un-pad + per-head extraction: head h's valid cols are [h*f,(h+1)*f) of its slab ----
    head_cols = [out_p[:n, h * hf + h * f: h * hf + (h + 1) * f] for h in range(heads)]
    if concat:
        return jnp.concatenate(head_cols, axis=1)
    if heads == 1:
        return head_cols[0]
    # heads > 1 with mean: finish epilogue here (not used by this model)
    out = sum(head_cols) / float(heads) + bias
    return jnp.where(out > 0.0, out, jnp.exp(jnp.minimum(out, 0.0)) - 1.0)


def gat_forward(x, edge_index, params, *, row_tile=None):
    """GAT.forward: returns (out, hidden); hidden == out (post-ELU conv2 output)."""
    n = x.shape[0]
    tm = row_tile if row_tile is not None else min(256, _round_up(n, 8))
    n_pad = _round_up(n, tm)

    # Additive softmax mask built directly in bf16: 0 where edge j->i (or self loop),
    # -1e30 elsewhere (exp underflows to exact 0 after the row-max subtraction).
    # TODO(synk): duplicate (src,dst) pairs collapse here; PyG's edge-list softmax would
    #             count repeated edges separately.
    src, dst = edge_index[0], edge_index[1]
    mask_bias = jnp.full((n_pad, n_pad), -1e30, jnp.bfloat16)
    mask_bias = mask_bias.at[dst, src].set(0.0)
    diag = jnp.arange(n_pad)
    mask_bias = mask_bias.at[diag, diag].set(0.0)   # add_self_loops (keeps padded rows finite)

    h1 = _gat_conv_pallas(x, mask_bias, params["w1"], params["a_src1"], params["a_dst1"],
                          params["b1"], heads=2, concat=True, tm=tm, n_pad=n_pad)
    out = _gat_conv_pallas(h1, mask_bias, params["w2"], params["a_src2"], params["a_dst2"],
                           params["b2"], heads=1, concat=False, tm=tm, n_pad=n_pad)
    # TODO(synk): self.hidden = x.detach().cpu() is a host transfer; we return the device array.
    return out, out


def init_params(key, in_c, hid_c, out_c, heads1=2):
    ks = jax.random.split(key, 8)

    def glorot(k, shape):
        fan_in, fan_out = shape[0], shape[-1]
        lim = jnp.sqrt(6.0 / (fan_in + fan_out))
        return jax.random.uniform(k, shape, jnp.float32, -lim, lim)

    return dict(
        w1=glorot(ks[0], (in_c, heads1 * hid_c)),
        a_src1=glorot(ks[1], (heads1, hid_c)),
        a_dst1=glorot(ks[2], (heads1, hid_c)),
        b1=0.1 * jax.random.normal(ks[3], (heads1 * hid_c,), jnp.float32),
        w2=glorot(ks[4], (heads1 * hid_c, out_c)),
        a_src2=glorot(ks[5], (1, out_c)),
        a_dst2=glorot(ks[6], (1, out_c)),
        b2=0.1 * jax.random.normal(ks[7], (out_c,), jnp.float32),
    )


def _reference(x, edge_index, params, negative_slope=0.2):
    """Pure-JAX (f32) dense GAT reference for correctness checking."""
    n = x.shape[0]
    mask = jnp.zeros((n, n), jnp.float32).at[edge_index[1], edge_index[0]].set(1.0)
    diag = jnp.arange(n)
    mask = mask.at[diag, diag].set(1.0)

    def layer(h_in, w, a_src, a_dst, b, heads, concat):
        f = w.shape[1] // heads
        xp = (h_in @ w).reshape(h_in.shape[0], heads, f)
        s = jnp.einsum("nhf,hf->hn", xp, a_src)
        d = jnp.einsum("nhf,hf->nh", xp, a_dst)
        outs = []
        for hh in range(heads):
            e = d[:, hh][:, None] + s[hh][None, :]
            e = jnp.where(e > 0, e, negative_slope * e)
            e = jnp.where(mask > 0, e, -jnp.inf)
            a = jax.nn.softmax(e, axis=1)
            outs.append(a @ xp[:, hh, :])
        out = jnp.concatenate(outs, axis=1) if concat else sum(outs) / heads
        return jax.nn.elu(out + b)

    h1 = layer(x, params["w1"], params["a_src1"], params["a_dst1"], params["b1"], 2, True)
    h2 = layer(h1, params["w2"], params["a_src2"], params["a_dst2"], params["b2"], 1, False)
    return h2


if __name__ == "__main__":
    key = jax.random.PRNGKey(0)
    N, E = 16, 48                       # nodes, directed edges
    in_c, hid_c, out_c = 8, 32, 4

    k_x, k_e, k_p = jax.random.split(key, 3)
    x = jax.random.normal(k_x, (N, in_c), jnp.float32)
    edge_index = jax.random.randint(k_e, (2, E), 0, N, dtype=jnp.int32)
    params = init_params(k_p, in_c, hid_c, out_c)

    fwd = jax.jit(gat_forward)
    out, hidden = fwd(x, edge_index, params)
    out = jax.block_until_ready(out)
    hidden = jax.block_until_ready(hidden)

    ref = _reference(x, edge_index, params)
    assert out.shape == (N, out_c), out.shape
    # bf16 MXU operands + approx reciprocal in the kernel vs. the f32 reference -> looser tol.
    assert jnp.allclose(out, ref, atol=5e-2, rtol=5e-2), float(jnp.max(jnp.abs(out - ref)))
    assert jnp.allclose(hidden, ref, atol=5e-2, rtol=5e-2)

    print("KERNEL_OK")
</pallas_src>

<mosaic_0001>
module attributes {stable_mosaic.version = 11 : i64} {
  func.func @_gat_attn_kernel(%arg0: i32, %arg1: memref<16x16xbf16, #tpu.memory_space<vmem>>, %arg2: memref<2x16xf32, #tpu.memory_space<vmem>>, %arg3: memref<16x2xf32, #tpu.memory_space<vmem>>, %arg4: memref<16x128xbf16, #tpu.memory_space<vmem>>, %arg5: memref<1x256xf32, #tpu.memory_space<vmem>>, %arg6: memref<16x256xf32, #tpu.memory_space<vmem>>) attributes {dimension_semantics = [#tpu.dimension_semantics<parallel>], iteration_bounds = array<i64: 1>, scalar_prefetch = 0 : i64, scratch_operands = 0 : i64, tpu.core_type = #tpu.core_type<tc>, window_params = [{transform_indices = @transform_0, window_bounds = array<i64: 16, 16>}, {pipeline_mode = #tpu.pipeline_mode<synchronous>, transform_indices = @transform_1, window_bounds = array<i64: 2, 16>}, {transform_indices = @transform_2, window_bounds = array<i64: 16, 2>}, {pipeline_mode = #tpu.pipeline_mode<synchronous>, transform_indices = @transform_3, window_bounds = array<i64: 16, 128>}, {pipeline_mode = #tpu.pipeline_mode<synchronous>, transform_indices = @transform_4, window_bounds = array<i64: 1, 256>}, {transform_indices = @transform_5, window_bounds = array<i64: 16, 256>}]} {
    %c0 = arith.constant 0 : index
    %c0_0 = arith.constant 0 : index
    %0 = vector.load %arg1[%c0, %c0_0] : memref<16x16xbf16, #tpu.memory_space<vmem>>, vector<16x16xbf16>
    %1 = arith.extf %0 : vector<16x16xbf16> to vector<16x16xf32>
    %c0_1 = arith.constant 0 : index
    %c0_2 = arith.constant 0 : index
    %2 = vector.load %arg4[%c0_1, %c0_2] : memref<16x128xbf16, #tpu.memory_space<vmem>>, vector<16x128xbf16>
    %c0_3 = arith.constant 0 : index
    %c0_4 = arith.constant 0 : index
    %3 = vector.load %arg3[%c0_3, %c0_4] : memref<16x2xf32, #tpu.memory_space<vmem>>, vector<16x1xf32>
    %c0_5 = arith.constant 0 : index
    %c0_6 = arith.constant 0 : index
    %4 = vector.load %arg2[%c0_5, %c0_6] : memref<2x16xf32, #tpu.memory_space<vmem>>, vector<1x16xf32>
    %5 = vector.broadcast %3 : vector<16x1xf32> to vector<16x16xf32>
    %6 = vector.broadcast %4 : vector<1x16xf32> to vector<16x16xf32>
    %7 = arith.addf %5, %6 : vector<16x16xf32>
    %cst = arith.constant 2.000000e-01 : f32
    %8 = vector.broadcast %cst : f32 to vector<16x16xf32>
    %9 = arith.mulf %8, %7 : vector<16x16xf32>
    %10 = arith.maximumf %7, %9 : vector<16x16xf32>
    %11 = arith.addf %10, %1 : vector<16x16xf32>
    %cst_7 = arith.constant dense<0xFF800000> : vector<16xf32>
    %12 = vector.multi_reduction <maximumf>, %11, %cst_7 [1] : vector<16x16xf32> to vector<16xf32>
    %13 = vector.shape_cast %12 : vector<16xf32> to vector<16x1xf32>
    %14 = vector.broadcast %13 : vector<16x1xf32> to vector<16x16xf32>
    %15 = arith.subf %11, %14 : vector<16x16xf32>
    %16 = math.exp %15 : vector<16x16xf32>
    %cst_8 = arith.constant dense<0.000000e+00> : vector<16xf32>
    %17 = vector.multi_reduction <add>, %16, %cst_8 [1] : vector<16x16xf32> to vector<16xf32>
    %18 = vector.shape_cast %17 : vector<16xf32> to vector<16x1xf32>
    %19 = arith.truncf %16 : vector<16x16xf32> to vector<16x16xbf16>
    %cst_9 = arith.constant dense<0.000000e+00> : vector<16x128xf32>
    %20 = tpu.matmul %19, %2, %cst_9 {dimension_numbers = #tpu.dot_dimension_numbers<[1], [0], [0], [1], [0, 0, 1, 1], [], []>} : vector<16x16xbf16>, vector<16x128xbf16>, vector<16x128xf32> -> vector<16x128xf32>
    %21 = tpu.reciprocal %18 {approx = true} : vector<16x1xf32> -> vector<16x1xf32>
    %22 = vector.broadcast %21 : vector<16x1xf32> to vector<16x128xf32>
    %23 = arith.mulf %20, %22 : vector<16x128xf32>
    %c0_10 = arith.constant 0 : index
    %c0_11 = arith.constant 0 : index
    %24 = vector.load %arg5[%c0_10, %c0_11] : memref<1x256xf32, #tpu.memory_space<vmem>>, vector<1x128xf32>
    %25 = vector.broadcast %24 : vector<1x128xf32> to vector<16x128xf32>
    %26 = arith.addf %23, %25 : vector<16x128xf32>
    %cst_12 = arith.constant 0.000000e+00 : f32
    %27 = vector.broadcast %cst_12 : f32 to vector<16x128xf32>
    %28 = arith.cmpf ogt, %26, %27 : vector<16x128xf32>
    %cst_13 = arith.constant 0.000000e+00 : f32
    %29 = vector.broadcast %cst_13 : f32 to vector<16x128xf32>
    %30 = arith.minimumf %26, %29 : vector<16x128xf32>
    %31 = math.exp %30 : vector<16x128xf32>
    %cst_14 = arith.constant 1.000000e+00 : f32
    %32 = vector.broadcast %cst_14 : f32 to vector<16x128xf32>
    %33 = arith.subf %31, %32 : vector<16x128xf32>
    %34 = arith.select %28, %26, %33 : vector<16x128xi1>, vector<16x128xf32>
    %c0_15 = arith.constant 0 : index
    %c0_16 = arith.constant 0 : index
    %35 = vector.load %arg6[%c0_15, %c0_16] : memref<16x256xf32, #tpu.memory_space<vmem>>, vector<16x128xf32>
    tpu.vector_store %arg6[%c0_15, %c0_16], %34 {strides = array<i32>} : memref<16x256xf32, #tpu.memory_space<vmem>>, vector<16x128xf32>,
    %c0_17 = arith.constant 0 : index
    %c1 = arith.constant 1 : index
    %36 = vector.load %arg3[%c0_17, %c1] : memref<16x2xf32, #tpu.memory_space<vmem>>, vector<16x1xf32>
    %c1_18 = arith.constant 1 : index
    %c0_19 = arith.constant 0 : index
    %37 = vector.load %arg2[%c1_18, %c0_19] : memref<2x16xf32, #tpu.memory_space<vmem>>, vector<1x16xf32>
    %38 = vector.broadcast %36 : vector<16x1xf32> to vector<16x16xf32>
    %39 = vector.broadcast %37 : vector<1x16xf32> to vector<16x16xf32>
    %40 = arith.addf %38, %39 : vector<16x16xf32>
    %cst_20 = arith.constant 2.000000e-01 : f32
    %41 = vector.broadcast %cst_20 : f32 to vector<16x16xf32>
    %42 = arith.mulf %41, %40 : vector<16x16xf32>
    %43 = arith.maximumf %40, %42 : vector<16x16xf32>
    %44 = arith.addf %43, %1 : vector<16x16xf32>
    %cst_21 = arith.constant dense<0xFF800000> : vector<16xf32>
    %45 = vector.multi_reduction <maximumf>, %44, %cst_21 [1] : vector<16x16xf32> to vector<16xf32>
    %46 = vector.shape_cast %45 : vector<16xf32> to vector<16x1xf32>
    %47 = vector.broadcast %46 : vector<16x1xf32> to vector<16x16xf32>
    %48 = arith.subf %44, %47 : vector<16x16xf32>
    %49 = math.exp %48 : vector<16x16xf32>
    %cst_22 = arith.constant dense<0.000000e+00> : vector<16xf32>
    %50 = vector.multi_reduction <add>, %49, %cst_22 [1] : vector<16x16xf32> to vector<16xf32>
    %51 = vector.shape_cast %50 : vector<16xf32> to vector<16x1xf32>
    %52 = arith.truncf %49 : vector<16x16xf32> to vector<16x16xbf16>
    %cst_23 = arith.constant dense<0.000000e+00> : vector<16x128xf32>
    %53 = tpu.matmul %52, %2, %cst_23 {dimension_numbers = #tpu.dot_dimension_numbers<[1], [0], [0], [1], [0, 0, 1, 1], [], []>} : vector<16x16xbf16>, vector<16x128xbf16>, vector<16x128xf32> -> vector<16x128xf32>
    %54 = tpu.reciprocal %51 {approx = true} : vector<16x1xf32> -> vector<16x1xf32>
    %55 = vector.broadcast %54 : vector<16x1xf32> to vector<16x128xf32>
    %56 = arith.mulf %53, %55 : vector<16x128xf32>
    %c0_24 = arith.constant 0 : index
    %c128 = arith.constant 128 : index
    %57 = vector.load %arg5[%c0_24, %c128] : memref<1x256xf32, #tpu.memory_space<vmem>>, vector<1x128xf32>
    %58 = vector.broadcast %57 : vector<1x128xf32> to vector<16x128xf32>
    %59 = arith.addf %56, %58 : vector<16x128xf32>
    %cst_25 = arith.constant 0.000000e+00 : f32
    %60 = vector.broadcast %cst_25 : f32 to vector<16x128xf32>
    %61 = arith.cmpf ogt, %59, %60 : vector<16x128xf32>
    %cst_26 = arith.constant 0.000000e+00 : f32
    %62 = vector.broadcast %cst_26 : f32 to vector<16x128xf32>
    %63 = arith.minimumf %59, %62 : vector<16x128xf32>
    %64 = math.exp %63 : vector<16x128xf32>
    %cst_27 = arith.constant 1.000000e+00 : f32
    %65 = vector.broadcast %cst_27 : f32 to vector<16x128xf32>
    %66 = arith.subf %64, %65 : vector<16x128xf32>
    %67 = arith.select %61, %59, %66 : vector<16x128xi1>, vector<16x128xf32>
    %c0_28 = arith.constant 0 : index
    %c128_29 = arith.constant 128 : index
    %68 = vector.load %arg6[%c0_28, %c128_29] : memref<16x256xf32, #tpu.memory_space<vmem>>, vector<16x128xf32>
    tpu.vector_store %arg6[%c0_28, %c128_29], %67 {strides = array<i32>} : memref<16x256xf32, #tpu.memory_space<vmem>>, vector<16x128xf32>,
    return
  }
  func.func @transform_0(%arg0: i32) -> (i32, i32) {
    %c0_i32 = arith.constant 0 : i32
    %c0_i32_0 = arith.constant 0 : i32
    return %arg0, %c0_i32 : i32, i32
  }
  func.func @transform_1(%arg0: i32) -> (i32, i32) {
    %c0_i32 = arith.constant 0 : i32
    %c0_i32_0 = arith.constant 0 : i32
    %c0_i32_1 = arith.constant 0 : i32
    return %c0_i32, %c0_i32_0 : i32, i32
  }
  func.func @transform_2(%arg0: i32) -> (i32, i32) {
    %c0_i32 = arith.constant 0 : i32
    %c0_i32_0 = arith.constant 0 : i32
    return %arg0, %c0_i32 : i32, i32
  }
  func.func @transform_3(%arg0: i32) -> (i32, i32) {
    %c0_i32 = arith.constant 0 : i32
    %c0_i32_0 = arith.constant 0 : i32
    %c0_i32_1 = arith.constant 0 : i32
    return %c0_i32, %c0_i32_0 : i32, i32
  }
  func.func @transform_4(%arg0: i32) -> (i32, i32) {
    %c0_i32 = arith.constant 0 : i32
    %c0_i32_0 = arith.constant 0 : i32
    %c0_i32_1 = arith.constant 0 : i32
    return %c0_i32, %c0_i32_0 : i32, i32
  }
  func.func @transform_5(%arg0: i32) -> (i32, i32) {
    %c0_i32 = arith.constant 0 : i32
    %c0_i32_0 = arith.constant 0 : i32
    return %arg0, %c0_i32 : i32, i32
  }
}

module attributes {stable_mosaic.version = 11 : i64} {
  func.func @_gat_attn_kernel(%arg0: i32, %arg1: memref<16x16xbf16, #tpu.memory_space<vmem>>, %arg2: memref<1x16xf32, #tpu.memory_space<vmem>>, %arg3: memref<16x1xf32, #tpu.memory_space<vmem>>, %arg4: memref<16x128xbf16, #tpu.memory_space<vmem>>, %arg5: memref<1x128xf32, #tpu.memory_space<vmem>>, %arg6: memref<16x128xf32, #tpu.memory_space<vmem>>) attributes {dimension_semantics = [#tpu.dimension_semantics<parallel>], iteration_bounds = array<i64: 1>, scalar_prefetch = 0 : i64, scratch_operands = 0 : i64, tpu.core_type = #tpu.core_type<tc>, window_params = [{transform_indices = @transform_0, window_bounds = array<i64: 16, 16>}, {pipeline_mode = #tpu.pipeline_mode<synchronous>, transform_indices = @transform_1, window_bounds = array<i64: 1, 16>}, {transform_indices = @transform_2, window_bounds = array<i64: 16, 1>}, {pipeline_mode = #tpu.pipeline_mode<synchronous>, transform_indices = @transform_3, window_bounds = array<i64: 16, 128>}, {pipeline_mode = #tpu.pipeline_mode<synchronous>, transform_indices = @transform_4, window_bounds = array<i64: 1, 128>}, {transform_indices = @transform_5, window_bounds = array<i64: 16, 128>}]} {
    %c0 = arith.constant 0 : index
    %c0_0 = arith.constant 0 : index
    %0 = vector.load %arg1[%c0, %c0_0] : memref<16x16xbf16, #tpu.memory_space<vmem>>, vector<16x16xbf16>
    %1 = arith.extf %0 : vector<16x16xbf16> to vector<16x16xf32>
    %c0_1 = arith.constant 0 : index
    %c0_2 = arith.constant 0 : index
    %2 = vector.load %arg4[%c0_1, %c0_2] : memref<16x128xbf16, #tpu.memory_space<vmem>>, vector<16x128xbf16>
    %c0_3 = arith.constant 0 : index
    %c0_4 = arith.constant 0 : index
    %3 = vector.load %arg3[%c0_3, %c0_4] : memref<16x1xf32, #tpu.memory_space<vmem>>, vector<16x1xf32>
    %c0_5 = arith.constant 0 : index
    %c0_6 = arith.constant 0 : index
    %4 = vector.load %arg2[%c0_5, %c0_6] : memref<1x16xf32, #tpu.memory_space<vmem>>, vector<1x16xf32>
    %5 = vector.broadcast %3 : vector<16x1xf32> to vector<16x16xf32>
    %6 = vector.broadcast %4 : vector<1x16xf32> to vector<16x16xf32>
    %7 = arith.addf %5, %6 : vector<16x16xf32>
    %cst = arith.constant 2.000000e-01 : f32
    %8 = vector.broadcast %cst : f32 to vector<16x16xf32>
    %9 = arith.mulf %8, %7 : vector<16x16xf32>
    %10 = arith.maximumf %7, %9 : vector<16x16xf32>
    %11 = arith.addf %10, %1 : vector<16x16xf32>
    %cst_7 = arith.constant dense<0xFF800000> : vector<16xf32>
    %12 = vector.multi_reduction <maximumf>, %11, %cst_7 [1] : vector<16x16xf32> to vector<16xf32>
    %13 = vector.shape_cast %12 : vector<16xf32> to vector<16x1xf32>
    %14 = vector.broadcast %13 : vector<16x1xf32> to vector<16x16xf32>
    %15 = arith.subf %11, %14 : vector<16x16xf32>
    %16 = math.exp %15 : vector<16x16xf32>
    %cst_8 = arith.constant dense<0.000000e+00> : vector<16xf32>
    %17 = vector.multi_reduction <add>, %16, %cst_8 [1] : vector<16x16xf32> to vector<16xf32>
    %18 = vector.shape_cast %17 : vector<16xf32> to vector<16x1xf32>
    %19 = arith.truncf %16 : vector<16x16xf32> to vector<16x16xbf16>
    %cst_9 = arith.constant dense<0.000000e+00> : vector<16x128xf32>
    %20 = tpu.matmul %19, %2, %cst_9 {dimension_numbers = #tpu.dot_dimension_numbers<[1], [0], [0], [1], [0, 0, 1, 1], [], []>} : vector<16x16xbf16>, vector<16x128xbf16>, vector<16x128xf32> -> vector<16x128xf32>
    %21 = tpu.reciprocal %18 {approx = true} : vector<16x1xf32> -> vector<16x1xf32>
    %22 = vector.broadcast %21 : vector<16x1xf32> to vector<16x128xf32>
    %23 = arith.mulf %20, %22 : vector<16x128xf32>
    %c0_10 = arith.constant 0 : index
    %c0_11 = arith.constant 0 : index
    %24 = vector.load %arg5[%c0_10, %c0_11] : memref<1x128xf32, #tpu.memory_space<vmem>>, vector<1x128xf32>
    %25 = vector.broadcast %24 : vector<1x128xf32> to vector<16x128xf32>
    %26 = arith.addf %23, %25 : vector<16x128xf32>
    %cst_12 = arith.constant 0.000000e+00 : f32
    %27 = vector.broadcast %cst_12 : f32 to vector<16x128xf32>
    %28 = arith.cmpf ogt, %26, %27 : vector<16x128xf32>
    %cst_13 = arith.constant 0.000000e+00 : f32
    %29 = vector.broadcast %cst_13 : f32 to vector<16x128xf32>
    %30 = arith.minimumf %26, %29 : vector<16x128xf32>
    %31 = math.exp %30 : vector<16x128xf32>
    %cst_14 = arith.constant 1.000000e+00 : f32
    %32 = vector.broadcast %cst_14 : f32 to vector<16x128xf32>
    %33 = arith.subf %31, %32 : vector<16x128xf32>
    %34 = arith.select %28, %26, %33 : vector<16x128xi1>, vector<16x128xf32>
    %c0_15 = arith.constant 0 : index
    %c0_16 = arith.constant 0 : index
    %35 = vector.load %arg6[%c0_15, %c0_16] : memref<16x128xf32, #tpu.memory_space<vmem>>, vector<16x128xf32>
    tpu.vector_store %arg6[%c0_15, %c0_16], %34 {strides = array<i32>} : memref<16x128xf32, #tpu.memory_space<vmem>>, vector<16x128xf32>,
    return
  }
  func.func @transform_0(%arg0: i32) -> (i32, i32) {
    %c0_i32 = arith.constant 0 : i32
    %c0_i32_0 = arith.constant 0 : i32
    return %arg0, %c0_i32 : i32, i32
  }
  func.func @transform_1(%arg0: i32) -> (i32, i32) {
    %c0_i32 = arith.constant 0 : i32
    %c0_i32_0 = arith.constant 0 : i32
    %c0_i32_1 = arith.constant 0 : i32
    return %c0_i32, %c0_i32_0 : i32, i32
  }
  func.func @transform_2(%arg0: i32) -> (i32, i32) {
    %c0_i32 = arith.constant 0 : i32
    %c0_i32_0 = arith.constant 0 : i32
    return %arg0, %c0_i32 : i32, i32
  }
  func.func @transform_3(%arg0: i32) -> (i32, i32) {
    %c0_i32 = arith.constant 0 : i32
    %c0_i32_0 = arith.constant 0 : i32
    %c0_i32_1 = arith.constant 0 : i32
    return %c0_i32, %c0_i32_0 : i32, i32
  }
  func.func @transform_4(%arg0: i32) -> (i32, i32) {
    %c0_i32 = arith.constant 0 : i32
    %c0_i32_0 = arith.constant 0 : i32
    %c0_i32_1 = arith.constant 0 : i32
    return %c0_i32, %c0_i32_0 : i32, i32
  }
  func.func @transform_5(%arg0: i32) -> (i32, i32) {
    %c0_i32 = arith.constant 0 : i32
    %c0_i32_0 = arith.constant 0 : i32
    return %arg0, %c0_i32 : i32, i32
  }
}

</mosaic_0001>

<llo_original>
// kernel: gat_forward.2
$region0: #{gat_forward.2}
  #allocation0 [shape = 'u32[]', space=smem, size = 0x4, offset = 0x4, fixed_abs, tag = 'smem constant byte address 0x4 - core index']
  #allocation1 [shape = 'u32[144,128]{1,0:T(1,128)}', space=vmem, size = 0x12000, scoped, tag = 'internal scratch']
  %s0 = inlined_call_operand.vmem [shape: bf16[16,16], index: 0, kind: input, shape index: {}]
  %s1 = inlined_call_operand.vmem [shape: f32[2,16], index: 1, kind: input, shape index: {}]
  %s2 = inlined_call_operand.vmem [shape: f32[16,2], index: 2, kind: input, shape index: {}]
  %s3 = inlined_call_operand.vmem [shape: bf16[16,128], index: 3, kind: input, shape index: {}]
  %s4 = inlined_call_operand.vmem [shape: f32[1,256], index: 4, kind: input, shape index: {}]
  %s5 = inlined_call_operand.vmem [shape: f32[16,256], index: 5, kind: output, shape index: {}]
  %s6 = sld [smem:[#allocation0]]
  $region30: #{gat_forward.2} parent=0
    _
  %s8 = ssub.s32 1, %s6
  %s9 = scalar_select 0, %s8, %s6
  // Predicated region
  $region2: #{gat_forward.2} parent=0 // pred_check
    _
  $region3: #{gat_forward.2} parent=0 // pred_check_branch
    %11 = sbr.rel (0) target = $region5
  $region4: #{gat_forward.2} parent=0 // pred_region
    _
  $region5: #{gat_forward.2} parent=0 // pred_fallthru
    _
  // Predicated region
  $region6: #{gat_forward.2} parent=0 // pred_check
    _
  $region7: #{gat_forward.2} parent=0 // pred_check_branch
    %13 = sbr.rel (0) target = $region9
  $region8: #{gat_forward.2} parent=0 // pred_region
    _
  $region9: #{gat_forward.2} parent=0 // pred_fallthru
    _
  // Predicated region
  $region10: #{gat_forward.2} parent=0 // pred_check
    _
  $region11: #{gat_forward.2} parent=0 // pred_check_branch
    %15 = sbr.rel (0) target = $region13
  $region12: #{gat_forward.2} parent=0 // pred_region
    _
  $region13: #{gat_forward.2} parent=0 // pred_fallthru
    _
  // Predicated region
  $region14: #{gat_forward.2} parent=0 // pred_check
    _
  $region15: #{gat_forward.2} parent=0 // pred_check_branch
    %17 = sbr.rel (0) target = $region17
  $region16: #{gat_forward.2} parent=0 // pred_region
    _
  $region17: #{gat_forward.2} parent=0 // pred_fallthru
    _
  // Predicated region
  $region18: #{gat_forward.2} parent=0 // pred_check
    _
  $region19: #{gat_forward.2} parent=0 // pred_check_branch
    %19 = sbr.rel (0) target = $region21
  $region20: #{gat_forward.2} parent=0 // pred_region
    _
  $region21: #{gat_forward.2} parent=0 // pred_fallthru
    _
  %v21 = vld [vmem:[%s0] sm:$0xf]
  %v22 = vld [vmem:[%s0 + $0x4] sm:$0xf]
  %v23 = vunpack.c.l.bf16 %v21
  %v24 = vunpack.c.l.bf16 %v22
  %v25 = vld [vmem:[%s3] sm:$0xf]
  %v26 = vld [vmem:[%s3 + $0x4] sm:$0xf]
  %v27 = vld [vmem:[%s2] sm:$0xff]
  %v28 = vld [vmem:[%s2 + $0x8] sm:$0xff]
  %v29 = vld [vmem:[%s1] sm:$0x1]
  %31 = vset.pattern.permute.xlu0 0
  %32 = vperm.xlu0 %31, %v27
  %v33 = vpop.permute.xlu0 %32
  %36 = vset.pattern.permute.xlu0 0
  %37 = vperm.xlu0 %36, %v28
  %v38 = vpop.permute.xlu0 %37
  %v40 = vlaneseq
  %v41 = vshrl.u32 %v40, 7
  %v42 = vsub.s32 0, %v41
  %v43 = vrot.slane %v29, %v42
  %v44 = vadd.f32 %v33, %v43
  %v45 = vadd.f32 %v38, %v43
  %v46 = vmul.f32 %v44, 0.2
  %v47 = vmul.f32 %v45, 0.2
  %v48 = vmax.f32 %v44, %v46
  %v49 = vmax.f32 %v45, %v47
  %v50 = vadd.f32 %v48, %v23
  %v51 = vadd.f32 %v49, %v24
  %vm52 = vcmask 130048
  %v53 = vsel %vm52, %v50, -inf
  %54 = vmax.xlane.f32.xlu0 %v53
  %v55 = vpop.xlane.xlu0 %54
  %v56 = vsel %vm52, %v51, -inf
  %57 = vmax.xlane.f32.xlu0 %v56
  %v58 = vpop.xlane.xlu0 %57
  %v59 = vsub.f32 %v50, %v55
  %v60 = vsub.f32 %v51, %v58
  %v61 = vmul.f32 %v59, 1.442695
  %v62 = vpow.pop %v61
  %v63 = vmul.f32 %v60, 1.442695
  %v64 = vpow.pop %v63
  %v65 = vsel %vm52, %v62, 0.0
  %66 = vadd.xlane.f32.xlu0 %v65
  %v67 = vpop.xlane.xlu0 %66
  %v68 = vsel %vm52, %v64, 0.0
  %69 = vadd.xlane.f32.xlu0 %v68
  %v70 = vpop.xlane.xlu0 %69
  %v71 = vpack.c.bf16 %v64, %v62
  %v74 = vunpack.c.l.b16 %v25
  %v75 = vunpack.c.l.b16 %v26
  %v76 = vpack.c.b16 %v75, %v74
  %v79 = vsel %vm52, %v71, 0
  %81 = vmatprep.subr.bf16.mxu0 0
  %82 = vmatpush1.bf16.msra.mxu0 %v76
  %83 = vmatprep.subr.bf16.mxu0 0
  %84 = vmatpush1.bf16.msra.mxu0 0
  %85 = vmatprep.subr.bf16.mxu0 0
  %86 = vmatpush1.bf16.msra.mxu0 0
  %87 = vmatprep.subr.bf16.mxu0 0
  %88 = vmatpush1.bf16.msra.mxu0 0
  %89 = vmatprep.subr.bf16.mxu0 0
  %90 = vmatpush1.bf16.msra.mxu0 0
  %91 = vmatprep.subr.bf16.mxu0 0
  %92 = vmatpush1.bf16.msra.mxu0 0
  %93 = vmatprep.subr.bf16.mxu0 0
  %94 = vmatpush1.bf16.msra.mxu0 0
  %95 = vmatprep.subr.bf16.mxu0 0
  %96 = vmatpush1.bf16.msra.mxu0 0
  %97 = vmatprep.subr.bf16.mxu0 0
  %98 = vmatpush1.bf16.msra.mxu0 0
  %99 = vmatprep.subr.bf16.mxu0 0
  %100 = vmatpush1.bf16.msra.mxu0 0
  %101 = vmatprep.subr.bf16.mxu0 0
  %102 = vmatpush1.bf16.msra.mxu0 0
  %103 = vmatprep.subr.bf16.mxu0 0
  %104 = vmatpush1.bf16.msra.mxu0 0
  %105 = vmatprep.subr.bf16.mxu0 0
  %106 = vmatpush1.bf16.msra.mxu0 0
  %107 = vmatprep.subr.bf16.mxu0 0
  %108 = vmatpush1.bf16.msra.mxu0 0
  %109 = vmatprep.subr.bf16.mxu0 0
  %110 = vmatpush1.bf16.msra.mxu0 0
  %111 = vmatprep.subr.bf16.mxu0 0
  %112 = vmatpush1.bf16.msra.mxu0 0
  %113 = vmatprep.mubr.bf16.mxu0 0
  %114 = vmatmul.mubr.bf16.gmra.mrb[0].mxu0 %v79
  %v115 = vpop.f32.mrb[0].mxu0
  %v116 = vadd.f32 0.0, %v115
  %v117 = vpop.f32.mrb[0].mxu0
  %v118 = vpop.f32.mrb[0].mxu0
  %v119 = vadd.f32 0.0, %v118
  %v120 = vpop.f32.mrb[0].mxu0
  %121 = vdwg.mxu0
  %v122 = vrcp.pop %v67
  %v123 = vrcp.pop %v70
  %v124 = vmul.f32 %v116, %v122
  %v125 = vmul.f32 %v119, %v123
  %v126 = vld [vmem:[%s4] sm:$0x1]
  %v128 = vlaneseq
  %v129 = vshrl.u32 %v128, 7
  %v130 = vsub.s32 0, %v129
  %v131 = vrot.slane %v126, %v130
  %v133 = vadd.f32 %v124, %v131
  %v134 = vadd.f32 %v125, %v131
  %vm135 = vcmp.gt.f32.partialorder %v133, 0.0
  %vm136 = vcmp.gt.f32.partialorder %v134, 0.0
  %v137 = vmin.f32 %v133, 0.0
  %v138 = vmin.f32 %v134, 0.0
  %v139 = vmul.f32 %v137, 1.442695
  %v140 = vpow.pop %v139
  %v141 = vmul.f32 %v138, 1.442695
  %v142 = vpow.pop %v141
  %v143 = vsub.f32 %v140, 1.0
  %v144 = vsub.f32 %v142, 1.0
  %v145 = vsel %vm135, %v133, %v143
  %v146 = vsel %vm136, %v134, %v144
  %147 = vst [vmem:[%s5] sm:$0xff] %v145
  %148 = vst [vmem:[%s5 + $0x10] sm:$0xff] %v146
  %v149 = vld [vmem:[%s2] sm:$0xff]
  %v150 = vld [vmem:[%s2 + $0x8] sm:$0xff]
  %v151 = vld [vmem:[%s1 + $0x1] sm:$0x1]
  %153 = vset.pattern.permute.xlu0 1
  %154 = vperm.xlu0 %153, %v149
  %v155 = vpop.permute.xlu0 %154
  %158 = vset.pattern.permute.xlu0 1
  %159 = vperm.xlu0 %158, %v150
  %v160 = vpop.permute.xlu0 %159
  %v162 = vlaneseq
  %v163 = vshrl.u32 %v162, 7
  %v164 = vsub.s32 0, %v163
  %v165 = vrot.slane %v151, %v164
  %v166 = vadd.f32 %v155, %v165
  %v167 = vadd.f32 %v160, %v165
  %v168 = vmul.f32 %v166, 0.2
  %v169 = vmul.f32 %v167, 0.2
  %v170 = vmax.f32 %v166, %v168
  %v171 = vmax.f32 %v167, %v169
  %v172 = vadd.f32 %v170, %v23
  %v173 = vadd.f32 %v171, %v24
  %v174 = vsel %vm52, %v172, -inf
  %175 = vmax.xlane.f32.xlu0 %v174
  %v176 = vpop.xlane.xlu0 %175
  %v177 = vsel %vm52, %v173, -inf
  %178 = vmax.xlane.f32.xlu0 %v177
  %v179 = vpop.xlane.xlu0 %178
  %v180 = vsub.f32 %v172, %v176
  %v181 = vsub.f32 %v173, %v179
  %v182 = vmul.f32 %v180, 1.442695
  %v183 = vpow.pop %v182
  %v184 = vmul.f32 %v181, 1.442695
  %v185 = vpow.pop %v184
  %v186 = vsel %vm52, %v183, 0.0
  %187 = vadd.xlane.f32.xlu0 %v186
  %v188 = vpop.xlane.xlu0 %187
  %v189 = vsel %vm52, %v185, 0.0
  %190 = vadd.xlane.f32.xlu0 %v189
  %v191 = vpop.xlane.xlu0 %190
  %v192 = vpack.c.bf16 %v185, %v183
  %v194 = vsel %vm52, %v192, 0
  %196 = vmatprep.subr.bf16.mxu0 0
  %197 = vmatpush1.bf16.msra.mxu0 %v76
  %198 = vmatprep.subr.bf16.mxu0 0
  %199 = vmatpush1.bf16.msra.mxu0 0
  %200 = vmatprep.subr.bf16.mxu0 0
  %201 = vmatpush1.bf16.msra.mxu0 0
  %202 = vmatprep.subr.bf16.mxu0 0
  %203 = vmatpush1.bf16.msra.mxu0 0
  %204 = vmatprep.subr.bf16.mxu0 0
  %205 = vmatpush1.bf16.msra.mxu0 0
  %206 = vmatprep.subr.bf16.mxu0 0
  %207 = vmatpush1.bf16.msra.mxu0 0
  %208 = vmatprep.subr.bf16.mxu0 0
  %209 = vmatpush1.bf16.msra.mxu0 0
  %210 = vmatprep.subr.bf16.mxu0 0
  %211 = vmatpush1.bf16.msra.mxu0 0
  %212 = vmatprep.subr.bf16.mxu0 0
  %213 = vmatpush1.bf16.msra.mxu0 0
  %214 = vmatprep.subr.bf16.mxu0 0
  %215 = vmatpush1.bf16.msra.mxu0 0
  %216 = vmatprep.subr.bf16.mxu0 0
  %217 = vmatpush1.bf16.msra.mxu0 0
  %218 = vmatprep.subr.bf16.mxu0 0
  %219 = vmatpush1.bf16.msra.mxu0 0
  %220 = vmatprep.subr.bf16.mxu0 0
  %221 = vmatpush1.bf16.msra.mxu0 0
  %222 = vmatprep.subr.bf16.mxu0 0
  %223 = vmatpush1.bf16.msra.mxu0 0
  %224 = vmatprep.subr.bf16.mxu0 0
  %225 = vmatpush1.bf16.msra.mxu0 0
  %226 = vmatprep.subr.bf16.mxu0 0
  %227 = vmatpush1.bf16.msra.mxu0 0
  %228 = vmatprep.mubr.bf16.mxu0 0
  %229 = vmatmul.mubr.bf16.gmra.mrb[0].mxu0 %v194
  %v230 = vpop.f32.mrb[0].mxu0
  %v231 = vadd.f32 0.0, %v230
  %v232 = vpop.f32.mrb[0].mxu0
  %v233 = vpop.f32.mrb[0].mxu0
  %v234 = vadd.f32 0.0, %v233
  %v235 = vpop.f32.mrb[0].mxu0
  %236 = vdwg.mxu0
  %v237 = vrcp.pop %v188
  %v238 = vrcp.pop %v191
  %v239 = vmul.f32 %v231, %v237
  %v240 = vmul.f32 %v234, %v238
  %v241 = vld [vmem:[%s4 + $0x1] sm:$0x1]
  %v243 = vlaneseq
  %v244 = vshrl.u32 %v243, 7
  %v245 = vsub.s32 0, %v244
  %v246 = vrot.slane %v241, %v245
  %v248 = vadd.f32 %v239, %v246
  %v249 = vadd.f32 %v240, %v246
  %vm250 = vcmp.gt.f32.partialorder %v248, 0.0
  %vm251 = vcmp.gt.f32.partialorder %v249, 0.0
  %v252 = vmin.f32 %v248, 0.0
  %v253 = vmin.f32 %v249, 0.0
  %v254 = vmul.f32 %v252, 1.442695
  %v255 = vpow.pop %v254
  %v256 = vmul.f32 %v253, 1.442695
  %v257 = vpow.pop %v256
  %v258 = vsub.f32 %v255, 1.0
  %v259 = vsub.f32 %v257, 1.0
  %v260 = vsel %vm250, %v248, %v258
  %v261 = vsel %vm251, %v249, %v259
  %262 = vst [vmem:[%s5 + $0x8] sm:$0xff] %v260
  %263 = vst [vmem:[%s5 + $0x18] sm:$0xff] %v261
  // Predicated region
  $region22: #{gat_forward.2} parent=0 // pred_check
    _
  $region23: #{gat_forward.2} parent=0 // pred_check_branch
    %265 = sbr.rel (0) target = $region25
  $region24: #{gat_forward.2} parent=0 // pred_region
    _
  $region25: #{gat_forward.2} parent=0 // pred_fallthru
    _
  // Predicated region
  $region26: #{gat_forward.2} parent=0 // pred_check
    _
  $region27: #{gat_forward.2} parent=0 // pred_check_branch
    %267 = sbr.rel (0) target = $region29
  $region28: #{gat_forward.2} parent=0 // pred_region
    _
  $region29: #{gat_forward.2} parent=0 // pred_fallthru
    _

// kernel: gat_forward.3
$region0: #{gat_forward.3}
  #allocation0 [shape = 'u32[]', space=smem, size = 0x4, offset = 0x4, fixed_abs, tag = 'smem constant byte address 0x4 - core index']
  #allocation1 [shape = 'u32[144,128]{1,0:T(1,128)}', space=vmem, size = 0x12000, scoped, tag = 'internal scratch']
  %s0 = inlined_call_operand.vmem [shape: bf16[16,16], index: 0, kind: input, shape index: {}]
  %s1 = inlined_call_operand.vmem [shape: f32[1,16], index: 1, kind: input, shape index: {}]
  %s2 = inlined_call_operand.vmem [shape: f32[16,1], index: 2, kind: input, shape index: {}]
  %s3 = inlined_call_operand.vmem [shape: bf16[16,128], index: 3, kind: input, shape index: {}]
  %s4 = inlined_call_operand.vmem [shape: f32[1,128], index: 4, kind: input, shape index: {}]
  %s5 = inlined_call_operand.vmem [shape: f32[16,128], index: 5, kind: output, shape index: {}]
  %s6 = sld [smem:[#allocation0]]
  $region30: #{gat_forward.3} parent=0
    _
  %s8 = ssub.s32 1, %s6
  %s9 = scalar_select 0, %s8, %s6
  // Predicated region
  $region2: #{gat_forward.3} parent=0 // pred_check
    _
  $region3: #{gat_forward.3} parent=0 // pred_check_branch
    %11 = sbr.rel (0) target = $region5
  $region4: #{gat_forward.3} parent=0 // pred_region
    _
  $region5: #{gat_forward.3} parent=0 // pred_fallthru
    _
  // Predicated region
  $region6: #{gat_forward.3} parent=0 // pred_check
    _
  $region7: #{gat_forward.3} parent=0 // pred_check_branch
    %13 = sbr.rel (0) target = $region9
  $region8: #{gat_forward.3} parent=0 // pred_region
    _
  $region9: #{gat_forward.3} parent=0 // pred_fallthru
    _
  // Predicated region
  $region10: #{gat_forward.3} parent=0 // pred_check
    _
  $region11: #{gat_forward.3} parent=0 // pred_check_branch
    %15 = sbr.rel (0) target = $region13
  $region12: #{gat_forward.3} parent=0 // pred_region
    _
  $region13: #{gat_forward.3} parent=0 // pred_fallthru
    _
  // Predicated region
  $region14: #{gat_forward.3} parent=0 // pred_check
    _
  $region15: #{gat_forward.3} parent=0 // pred_check_branch
    %17 = sbr.rel (0) target = $region17
  $region16: #{gat_forward.3} parent=0 // pred_region
    _
  $region17: #{gat_forward.3} parent=0 // pred_fallthru
    _
  // Predicated region
  $region18: #{gat_forward.3} parent=0 // pred_check
    _
  $region19: #{gat_forward.3} parent=0 // pred_check_branch
    %19 = sbr.rel (0) target = $region21
  $region20: #{gat_forward.3} parent=0 // pred_region
    _
  $region21: #{gat_forward.3} parent=0 // pred_fallthru
    _
  %v21 = vld [vmem:[%s0] sm:$0xf]
  %v22 = vld [vmem:[%s0 + $0x4] sm:$0xf]
  %v23 = vunpack.c.l.bf16 %v21
  %v24 = vunpack.c.l.bf16 %v22
  %v25 = vld [vmem:[%s3] sm:$0xf]
  %v26 = vld [vmem:[%s3 + $0x4] sm:$0xf]
  %v27 = vld [vmem:[%s2] sm:$0xff]
  %v28 = vld [vmem:[%s2 + $0x8] sm:$0xff]
  %v29 = vld [vmem:[%s1] sm:$0x1]
  %31 = vset.pattern.permute.xlu0 0
  %32 = vperm.xlu0 %31, %v27
  %v33 = vpop.permute.xlu0 %32
  %36 = vset.pattern.permute.xlu0 0
  %37 = vperm.xlu0 %36, %v28
  %v38 = vpop.permute.xlu0 %37
  %v41 = vlaneseq
  %v42 = vshrl.u32 %v41, 7
  %v43 = vsub.s32 0, %v42
  %v44 = vrot.slane %v29, %v43
  %v46 = vadd.f32 %v33, %v44
  %v47 = vadd.f32 %v38, %v44
  %v48 = vmul.f32 %v46, 0.2
  %v49 = vmul.f32 %v47, 0.2
  %v50 = vmax.f32 %v46, %v48
  %v51 = vmax.f32 %v47, %v49
  %v52 = vadd.f32 %v50, %v23
  %v53 = vadd.f32 %v51, %v24
  %vm54 = vcmask 130048
  %v55 = vsel %vm54, %v52, -inf
  %56 = vmax.xlane.f32.xlu0 %v55
  %v57 = vpop.xlane.xlu0 %56
  %v58 = vsel %vm54, %v53, -inf
  %59 = vmax.xlane.f32.xlu0 %v58
  %v60 = vpop.xlane.xlu0 %59
  %v61 = vsub.f32 %v52, %v57
  %v62 = vsub.f32 %v53, %v60
  %v63 = vmul.f32 %v61, 1.442695
  %v64 = vpow.pop %v63
  %v65 = vmul.f32 %v62, 1.442695
  %v66 = vpow.pop %v65
  %v67 = vsel %vm54, %v64, 0.0
  %68 = vadd.xlane.f32.xlu0 %v67
  %v69 = vpop.xlane.xlu0 %68
  %v70 = vsel %vm54, %v66, 0.0
  %71 = vadd.xlane.f32.xlu0 %v70
  %v72 = vpop.xlane.xlu0 %71
  %v73 = vpack.c.bf16 %v66, %v64
  %v76 = vunpack.c.l.b16 %v25
  %v77 = vunpack.c.l.b16 %v26
  %v78 = vpack.c.b16 %v77, %v76
  %v81 = vsel %vm54, %v73, 0
  %83 = vmatprep.subr.bf16.mxu0 0
  %84 = vmatpush1.bf16.msra.mxu0 %v78
  %85 = vmatprep.subr.bf16.mxu0 0
  %86 = vmatpush1.bf16.msra.mxu0 0
  %87 = vmatprep.subr.bf16.mxu0 0
  %88 = vmatpush1.bf16.msra.mxu0 0
  %89 = vmatprep.subr.bf16.mxu0 0
  %90 = vmatpush1.bf16.msra.mxu0 0
  %91 = vmatprep.subr.bf16.mxu0 0
  %92 = vmatpush1.bf16.msra.mxu0 0
  %93 = vmatprep.subr.bf16.mxu0 0
  %94 = vmatpush1.bf16.msra.mxu0 0
  %95 = vmatprep.subr.bf16.mxu0 0
  %96 = vmatpush1.bf16.msra.mxu0 0
  %97 = vmatprep.subr.bf16.mxu0 0
  %98 = vmatpush1.bf16.msra.mxu0 0
  %99 = vmatprep.subr.bf16.mxu0 0
  %100 = vmatpush1.bf16.msra.mxu0 0
  %101 = vmatprep.subr.bf16.mxu0 0
  %102 = vmatpush1.bf16.msra.mxu0 0
  %103 = vmatprep.subr.bf16.mxu0 0
  %104 = vmatpush1.bf16.msra.mxu0 0
  %105 = vmatprep.subr.bf16.mxu0 0
  %106 = vmatpush1.bf16.msra.mxu0 0
  %107 = vmatprep.subr.bf16.mxu0 0
  %108 = vmatpush1.bf16.msra.mxu0 0
  %109 = vmatprep.subr.bf16.mxu0 0
  %110 = vmatpush1.bf16.msra.mxu0 0
  %111 = vmatprep.subr.bf16.mxu0 0
  %112 = vmatpush1.bf16.msra.mxu0 0
  %113 = vmatprep.subr.bf16.mxu0 0
  %114 = vmatpush1.bf16.msra.mxu0 0
  %115 = vmatprep.mubr.bf16.mxu0 0
  %116 = vmatmul.mubr.bf16.gmra.mrb[0].mxu0 %v81
  %v117 = vpop.f32.mrb[0].mxu0
  %v118 = vadd.f32 0.0, %v117
  %v119 = vpop.f32.mrb[0].mxu0
  %v120 = vpop.f32.mrb[0].mxu0
  %v121 = vadd.f32 0.0, %v120
  %v122 = vpop.f32.mrb[0].mxu0
  %123 = vdwg.mxu0
  %v124 = vrcp.pop %v69
  %v125 = vrcp.pop %v72
  %v126 = vmul.f32 %v118, %v124
  %v127 = vmul.f32 %v121, %v125
  %v128 = vld [vmem:[%s4] sm:$0x1]
  %v130 = vlaneseq
  %v131 = vshrl.u32 %v130, 7
  %v132 = vsub.s32 0, %v131
  %v133 = vrot.slane %v128, %v132
  %v135 = vadd.f32 %v126, %v133
  %v136 = vadd.f32 %v127, %v133
  %vm137 = vcmp.gt.f32.partialorder %v135, 0.0
  %vm138 = vcmp.gt.f32.partialorder %v136, 0.0
  %v139 = vmin.f32 %v135, 0.0
  %v140 = vmin.f32 %v136, 0.0
  %v141 = vmul.f32 %v139, 1.442695
  %v142 = vpow.pop %v141
  %v143 = vmul.f32 %v140, 1.442695
  %v144 = vpow.pop %v143
  %v145 = vsub.f32 %v142, 1.0
  %v146 = vsub.f32 %v144, 1.0
  %v147 = vsel %vm137, %v135, %v145
  %v148 = vsel %vm138, %v136, %v146
  %149 = vst [vmem:[%s5] sm:$0xff] %v147
  %150 = vst [vmem:[%s5 + $0x8] sm:$0xff] %v148
  // Predicated region
  $region22: #{gat_forward.3} parent=0 // pred_check
    _
  $region23: #{gat_forward.3} parent=0 // pred_check_branch
    %152 = sbr.rel (0) target = $region25
  $region24: #{gat_forward.3} parent=0 // pred_region
    _
  $region25: #{gat_forward.3} parent=0 // pred_fallthru
    _
  // Predicated region
  $region26: #{gat_forward.3} parent=0 // pred_check
    _
  $region27: #{gat_forward.3} parent=0 // pred_check_branch
    %154 = sbr.rel (0) target = $region29
  $region28: #{gat_forward.3} parent=0 // pred_region
    _
  $region29: #{gat_forward.3} parent=0 // pred_fallthru
    _

</llo_original>
